<compile_context>
chip_gen: v5e
topology: v5e:2x2
jax: 0.10.0
libtpu: 0.0.40
codegen_flags: <defaults>
</compile_context>

<pallas_src>
import math

import jax
import jax.numpy as jnp
from jax.experimental import pallas as pl
from jax.experimental.pallas import tpu as pltpu


def _round_up(x, m):
    return ((x + m - 1) // m) * m


def _vmem_capacity_bytes():
    """Physical VMEM per TensorCore, with a safe fallback."""
    try:
        info = pltpu.get_tpu_info()
        for name in ("vmem_capacity_bytes", "vmem_bytes", "vmem_size_bytes"):
            v = getattr(info, name, None)
            if v:
                return int(v)
    except Exception:
        pass
    return 128 * 1024 * 1024


def _weight_block_bytes(E, th, Ep):
    # Double-buffered bf16 W1/W2 chunks + f32 bias chunks.
    return 2 * (E * th * 2 + th * Ep * 2 + th * 4 + Ep * 4)


def _pick_hidden_tile(E, H, Ep, budget):
    """Return (th, Hp): hidden tile (128-multiple) and zero-padded hidden size."""
    Hp = _round_up(H, 128)
    if _weight_block_bytes(E, Hp, Ep) <= budget // 2:
        return Hp, Hp                      # weights fully resident, n_h == 1
    th = 512
    while th > 128 and _weight_block_bytes(E, th, Ep) > budget // 2:
        th -= 128
    return th, _round_up(H, th)


def _pick_row_tile(M, E, Ep, th, budget, target=768):
    """Largest row tile that fits the remaining VMEM budget (<= target rows)."""
    Mp = _round_up(M, 8)
    per_row = 2 * (E * 4 + Ep * 4)         # double-buffered f32 x block + f32 out block
    avail = max(budget - _weight_block_bytes(E, th, Ep), per_row * 8)
    tm = min(target, avail // per_row, Mp)
    if tm >= 256:
        tm = (tm // 256) * 256             # 256-aligned for 2x256 MXUs (v6e/v7x)
    else:
        tm = max(8, (tm // 8) * 8)         # sublane aligned
    # Megacore (v7x has 2 TCs): prefer >= 2 row tiles when there's enough work.
    if tm >= Mp and Mp >= 512:
        tm = max(256, _round_up((Mp + 1) // 2, 8))
    return tm


def ffn_kernel(x_ref, w1_ref, b1_ref, w2_ref, b2_ref, o_ref):
    # x_ref:  (tm, E)  f32    w1_ref: (E, th) bf16   b1_ref: (1, th) f32
    # w2_ref: (th, Ep) bf16   b2_ref: (1, Ep) f32    o_ref:  (tm, Ep) f32 (resident acc)
    h_idx = pl.program_id(1)

    @pl.when(h_idx == 0)
    def _():
        o_ref[...] = jnp.zeros_like(o_ref)

    # Cast the activation tile to bf16 in-kernel (no wrapper-side cast pass).
    x = x_ref[...].astype(jnp.bfloat16)
    # First linear chunk: bf16 operands, f32 accumulation on the MXU.
    h = jnp.dot(x, w1_ref[...], preferred_element_type=jnp.float32)
    # Bias + ReLU epilogue in f32 (no bf16 VPU needed -> v5e friendly).
    h = jnp.maximum(h + b1_ref[...], 0.0)
    # Second linear: contract this hidden chunk, accumulate into the output block.
    o_ref[...] += jnp.dot(h.astype(jnp.bfloat16), w2_ref[...],
                          preferred_element_type=jnp.float32)

    @pl.when(h_idx == pl.num_programs(1) - 1)
    def _():
        # Dropout (eval mode) == identity.
        o_ref[...] += b2_ref[...]


def prepare_params(w1, b1, w2, b2, *, vmem_budget=None):
    """One-time cast/pad of parameters to kernel layout (do NOT repeat per call)."""
    E, H = w1.shape
    Ep = _round_up(E, 128)                                  # lane-dense output dim
    budget = vmem_budget if vmem_budget is not None else (_vmem_capacity_bytes() * 3) // 4
    th, Hp = _pick_hidden_tile(E, H, Ep, budget)
    w1b = jnp.pad(w1, ((0, 0), (0, Hp - H))).astype(jnp.bfloat16)
    b1r = jnp.pad(b1, (0, Hp - H)).reshape(1, Hp).astype(jnp.float32)
    w2b = jnp.pad(w2, ((0, Hp - H), (0, Ep - E))).astype(jnp.bfloat16)
    b2r = jnp.pad(b2, (0, Ep - E)).reshape(1, Ep).astype(jnp.float32)
    return dict(w1=w1b, b1=b1r, w2=w2b, b2=b2r,
                E=E, H=H, Hp=Hp, Ep=Ep, th=th, vmem_budget=budget)


def feed_forward(x, params):
    """x: [B, T, E] float32.  params: output of prepare_params (H = 4E)."""
    w1b, b1r, w2b, b2r = params["w1"], params["b1"], params["w2"], params["b2"]
    E, Hp, Ep, th = params["E"], params["Hp"], params["Ep"], params["th"]
    budget = params["vmem_budget"]

    B, T, _ = x.shape
    M = B * T
    Mp = _round_up(M, 8)                                    # pad rows to sublanes only

    tm = _pick_row_tile(M, E, Ep, th, budget)
    n_rows = pl.cdiv(Mp, tm)
    n_h = Hp // th

    x2 = x.reshape(M, E)
    if Mp != M:
        x2 = jnp.pad(x2, ((0, Mp - M), (0, 0)))

    flops = 4 * M * E * Hp                                  # two matmuls: 2*M*E*H each
    weight_stream = n_rows if n_h > 1 else 1                # weights re-streamed per row tile
    bytes_accessed = (Mp * E * 4 + Mp * Ep * 4
                      + weight_stream * (E * Hp * 2 + Hp * Ep * 2)
                      + Hp * 4 + Ep * 4)

    out2 = pl.pallas_call(
        ffn_kernel,
        out_shape=jax.ShapeDtypeStruct((Mp, Ep), jnp.float32),
        grid_spec=pltpu.PrefetchScalarGridSpec(
            num_scalar_prefetch=0,
            grid=(n_rows, n_h),                             # reduction (hidden) axis last
            in_specs=[
                pl.BlockSpec((tm, E), lambda i, h: (i, 0)),   # x row tile (f32)
                pl.BlockSpec((E, th), lambda i, h: (0, h)),   # W1 hidden chunk (bf16)
                pl.BlockSpec((1, th), lambda i, h: (0, h)),   # b1 hidden chunk (f32)
                pl.BlockSpec((th, Ep), lambda i, h: (h, 0)),  # W2 hidden chunk (bf16)
                pl.BlockSpec((1, Ep), lambda i, h: (0, 0)),   # b2 (resident)
            ],
            out_specs=pl.BlockSpec((tm, Ep), lambda i, h: (i, 0)),   # resident accumulator
        ),
        compiler_params=pltpu.CompilerParams(
            dimension_semantics=("parallel", "arbitrary"),
            vmem_limit_bytes=budget,
        ),
        cost_estimate=pl.CostEstimate(
            flops=flops, transcendentals=0, bytes_accessed=bytes_accessed
        ),
    )(x2, w1b, b1r, w2b, b2r)

    return out2[:M, :E].reshape(B, T, E)


def init_params(key, n_embed):
    """Deterministic init mirroring nn.Linear default (U[-1/sqrt(fan_in), +])."""
    hidden = 4 * n_embed
    k1, k2, k3, k4 = jax.random.split(key, 4)
    bound1 = 1.0 / math.sqrt(n_embed)
    bound2 = 1.0 / math.sqrt(hidden)
    # Stored pre-transposed as [in, out] so the kernel does x @ W directly.
    w1 = jax.random.uniform(k1, (n_embed, hidden), jnp.float32, -bound1, bound1)
    b1 = jax.random.uniform(k2, (hidden,), jnp.float32, -bound1, bound1)
    w2 = jax.random.uniform(k3, (hidden, n_embed), jnp.float32, -bound2, bound2)
    b2 = jax.random.uniform(k4, (n_embed,), jnp.float32, -bound2, bound2)
    return w1, b1, w2, b2


if __name__ == "__main__":
    # args.n_embed = 32, args.dropout = 0.1 (identity in eval mode)
    B, T, n_embed = 2, 8, 32

    key = jax.random.PRNGKey(0)
    kx, kp = jax.random.split(key)
    x = jax.random.normal(kx, (B, T, n_embed), dtype=jnp.float32)
    w1, b1, w2, b2 = init_params(kp, n_embed)
    params = prepare_params(w1, b1, w2, b2)

    out = jax.block_until_ready(feed_forward(x, params))

    # Pure-JAX reference with the same bf16-operand / f32-accumulate math.
    xb = x.reshape(-1, n_embed).astype(jnp.bfloat16)
    h = jnp.dot(xb, w1.astype(jnp.bfloat16), preferred_element_type=jnp.float32) + b1
    h = jnp.maximum(h, 0.0)
    ref = (jnp.dot(h.astype(jnp.bfloat16), w2.astype(jnp.bfloat16),
                   preferred_element_type=jnp.float32) + b2).reshape(B, T, n_embed)

    assert out.shape == (B, T, n_embed)
    assert jnp.allclose(out, ref, atol=1e-2, rtol=1e-2), float(
        jnp.max(jnp.abs(out - ref))
    )

    print("KERNEL_OK")
</pallas_src>

<mosaic_0001>
module attributes {stable_mosaic.version = 11 : i64} {
  func.func @ffn_kernel(%arg0: i32, %arg1: i32, %arg2: memref<16x32xf32, #tpu.memory_space<vmem>>, %arg3: memref<32x128xbf16, #tpu.memory_space<vmem>>, %arg4: memref<1x128xf32, #tpu.memory_space<vmem>>, %arg5: memref<128x128xbf16, #tpu.memory_space<vmem>>, %arg6: memref<1x128xf32, #tpu.memory_space<vmem>>, %arg7: memref<16x128xf32, #tpu.memory_space<vmem>>) attributes {dimension_semantics = [#tpu.dimension_semantics<parallel>, #tpu.dimension_semantics<arbitrary>], iteration_bounds = array<i64: 1, 1>, scalar_prefetch = 0 : i64, scratch_operands = 0 : i64, tpu.core_type = #tpu.core_type<tc>, window_params = [{transform_indices = @transform_0, window_bounds = array<i64: 16, 32>}, {transform_indices = @transform_1, window_bounds = array<i64: 32, 128>}, {transform_indices = @transform_2, window_bounds = array<i64: 1, 128>}, {transform_indices = @transform_3, window_bounds = array<i64: 128, 128>}, {pipeline_mode = #tpu.pipeline_mode<synchronous>, transform_indices = @transform_4, window_bounds = array<i64: 1, 128>}, {transform_indices = @transform_5, window_bounds = array<i64: 16, 128>}]} {
    %c0_i32 = arith.constant 0 : i32
    %0 = arith.cmpi eq, %arg1, %c0_i32 : i32
    %1 = arith.extui %0 : i1 to i32
    %c0_i32_0 = arith.constant 0 : i32
    %2 = arith.cmpi ne, %1, %c0_i32_0 : i32
    scf.if %2 {
      %cst_16 = arith.constant 0.000000e+00 : f32
      %21 = vector.broadcast %cst_16 : f32 to vector<16x128xf32>
      %c0_17 = arith.constant 0 : index
      %c0_18 = arith.constant 0 : index
      %22 = vector.load %arg7[%c0_17, %c0_18] : memref<16x128xf32, #tpu.memory_space<vmem>>, vector<16x128xf32>
      tpu.vector_store %arg7[%c0_17, %c0_18], %21 {strides = array<i32>} : memref<16x128xf32, #tpu.memory_space<vmem>>, vector<16x128xf32>,
    } else {
    }
    %c0 = arith.constant 0 : index
    %c0_1 = arith.constant 0 : index
    %3 = vector.load %arg2[%c0, %c0_1] : memref<16x32xf32, #tpu.memory_space<vmem>>, vector<16x32xf32>
    %4 = arith.truncf %3 : vector<16x32xf32> to vector<16x32xbf16>
    %c0_2 = arith.constant 0 : index
    %c0_3 = arith.constant 0 : index
    %5 = vector.load %arg3[%c0_2, %c0_3] : memref<32x128xbf16, #tpu.memory_space<vmem>>, vector<32x128xbf16>
    %cst = arith.constant dense<0.000000e+00> : vector<16x128xf32>
    %6 = tpu.matmul %4, %5, %cst {dimension_numbers = #tpu.dot_dimension_numbers<[1], [0], [0], [1], [0, 0, 1, 1], [], []>} : vector<16x32xbf16>, vector<32x128xbf16>, vector<16x128xf32> -> vector<16x128xf32>
    %c0_4 = arith.constant 0 : index
    %c0_5 = arith.constant 0 : index
    %7 = vector.load %arg4[%c0_4, %c0_5] : memref<1x128xf32, #tpu.memory_space<vmem>>, vector<1x128xf32>
    %8 = vector.broadcast %7 : vector<1x128xf32> to vector<16x128xf32>
    %9 = arith.addf %6, %8 : vector<16x128xf32>
    %cst_6 = arith.constant 0.000000e+00 : f32
    %10 = vector.broadcast %cst_6 : f32 to vector<16x128xf32>
    %11 = arith.maximumf %9, %10 : vector<16x128xf32>
    %c0_7 = arith.constant 0 : index
    %c0_8 = arith.constant 0 : index
    %12 = vector.load %arg7[%c0_7, %c0_8] : memref<16x128xf32, #tpu.memory_space<vmem>>, vector<16x128xf32>
    %13 = arith.truncf %11 : vector<16x128xf32> to vector<16x128xbf16>
    %c0_9 = arith.constant 0 : index
    %c0_10 = arith.constant 0 : index
    %14 = vector.load %arg5[%c0_9, %c0_10] : memref<128x128xbf16, #tpu.memory_space<vmem>>, vector<128x128xbf16>
    %cst_11 = arith.constant dense<0.000000e+00> : vector<16x128xf32>
    %15 = tpu.matmul %13, %14, %cst_11 {dimension_numbers = #tpu.dot_dimension_numbers<[1], [0], [0], [1], [0, 0, 1, 1], [], []>} : vector<16x128xbf16>, vector<128x128xbf16>, vector<16x128xf32> -> vector<16x128xf32>
    %16 = arith.addf %12, %15 : vector<16x128xf32>
    %c0_12 = arith.constant 0 : index
    %c0_13 = arith.constant 0 : index
    %17 = vector.load %arg7[%c0_12, %c0_13] : memref<16x128xf32, #tpu.memory_space<vmem>>, vector<16x128xf32>
    tpu.vector_store %arg7[%c0_12, %c0_13], %16 {strides = array<i32>} : memref<16x128xf32, #tpu.memory_space<vmem>>, vector<16x128xf32>,
    %c0_i32_14 = arith.constant 0 : i32
    %18 = arith.cmpi eq, %arg1, %c0_i32_14 : i32
    %19 = arith.extui %18 : i1 to i32
    %c0_i32_15 = arith.constant 0 : i32
    %20 = arith.cmpi ne, %19, %c0_i32_15 : i32
    scf.if %20 {
      %c0_16 = arith.constant 0 : index
      %c0_17 = arith.constant 0 : index
      %21 = vector.load %arg7[%c0_16, %c0_17] : memref<16x128xf32, #tpu.memory_space<vmem>>, vector<16x128xf32>
      %c0_18 = arith.constant 0 : index
      %c0_19 = arith.constant 0 : index
      %22 = vector.load %arg6[%c0_18, %c0_19] : memref<1x128xf32, #tpu.memory_space<vmem>>, vector<1x128xf32>
      %23 = vector.broadcast %22 : vector<1x128xf32> to vector<16x128xf32>
      %24 = arith.addf %21, %23 : vector<16x128xf32>
      %c0_20 = arith.constant 0 : index
      %c0_21 = arith.constant 0 : index
      %25 = vector.load %arg7[%c0_20, %c0_21] : memref<16x128xf32, #tpu.memory_space<vmem>>, vector<16x128xf32>
      tpu.vector_store %arg7[%c0_20, %c0_21], %24 {strides = array<i32>} : memref<16x128xf32, #tpu.memory_space<vmem>>, vector<16x128xf32>,
    } else {
    }
    return
  }
  func.func @transform_0(%arg0: i32, %arg1: i32) -> (i32, i32) {
    %c0_i32 = arith.constant 0 : i32
    %c0_i32_0 = arith.constant 0 : i32
    return %arg0, %c0_i32 : i32, i32
  }
  func.func @transform_1(%arg0: i32, %arg1: i32) -> (i32, i32) {
    %c0_i32 = arith.constant 0 : i32
    %c0_i32_0 = arith.constant 0 : i32
    return %c0_i32, %arg1 : i32, i32
  }
  func.func @transform_2(%arg0: i32, %arg1: i32) -> (i32, i32) {
    %c0_i32 = arith.constant 0 : i32
    %c0_i32_0 = arith.constant 0 : i32
    return %c0_i32, %arg1 : i32, i32
  }
  func.func @transform_3(%arg0: i32, %arg1: i32) -> (i32, i32) {
    %c0_i32 = arith.constant 0 : i32
    %c0_i32_0 = arith.constant 0 : i32
    return %arg1, %c0_i32 : i32, i32
  }
  func.func @transform_4(%arg0: i32, %arg1: i32) -> (i32, i32) {
    %c0_i32 = arith.constant 0 : i32
    %c0_i32_0 = arith.constant 0 : i32
    %c0_i32_1 = arith.constant 0 : i32
    return %c0_i32, %c0_i32_0 : i32, i32
  }
  func.func @transform_5(%arg0: i32, %arg1: i32) -> (i32, i32) {
    %c0_i32 = arith.constant 0 : i32
    %c0_i32_0 = arith.constant 0 : i32
    return %arg0, %c0_i32 : i32, i32
  }
}

</mosaic_0001>

<llo_original>
// kernel: tpu_custom_call.1
$region0: #{tpu_custom_call.1}
  #allocation0 [shape = 'u32[]', space=smem, size = 0x4, offset = 0x4, fixed_abs, tag = 'smem constant byte address 0x4 - core index']
  #allocation1 [shape = 'u32[72,128]{1,0:T(1,128)}', space=vmem, size = 0x9000, scoped, tag = 'internal scratch']
  %s0 = inlined_call_operand.hbm [shape: f32[16,32], index: 0, kind: input, shape index: {}]
  %s1 = inlined_call_operand.hbm [shape: bf16[32,128], index: 1, kind: input, shape index: {}]
  %s2 = inlined_call_operand.vmem [shape: f32[1,128], index: 2, kind: input, shape index: {}]
  %s3 = inlined_call_operand.hbm [shape: bf16[128,128], index: 3, kind: input, shape index: {}]
  %s4 = inlined_call_operand.vmem [shape: f32[1,128], index: 4, kind: input, shape index: {}]
  %s5 = inlined_call_operand.hbm [shape: f32[16,128], index: 5, kind: output, shape index: {}]
  %s6 = sld [smem:[#allocation0]]
  $region50: #{tpu_custom_call.1} parent=0
    _
  %s8 = ssub.s32 1, %s6
  %s9 = scalar_select 0, %s8, %s6
  $region1: #{tpu_custom_call.1} parent=0
    #allocation2 [shape = 'u8[8192]{0}', space=vmem, size = 0x2000, scoped, tag = 'input window, operand 0, single buffered']
    #allocation3 [shape = 's32[1]{0}', space=sflag, size = 0x4, scoped, tag = 'scoped memory for tpu_custom_call.1']
    #allocation4 [shape = 's32[1]{0}', space=sflag, size = 0x4, scoped, tag = 'scoped memory for tpu_custom_call.1']
    #allocation5 [shape = 'u8[8192]{0}', space=vmem, size = 0x2000, scoped, tag = 'input window, operand 1, single buffered']
    #allocation6 [shape = 's32[1]{0}', space=sflag, size = 0x4, scoped, tag = 'scoped memory for tpu_custom_call.1']
    #allocation7 [shape = 'u8[32768]{0}', space=vmem, size = 0x8000, scoped, tag = 'input window, operand 3, single buffered']
    #allocation8 [shape = 'u8[8192]{0}', space=vmem, size = 0x2000, scoped, tag = 'output window, operand 0, single buffered']
    %10 = vsyncpa [#allocation3], 0
    %11 = vsyncpa [#allocation6], 0
    %12 = vsyncpa [#allocation4], 0
    // Predicated region
    $region2: #{tpu_custom_call.1} parent=1 // pred_check
      _
    $region3: #{tpu_custom_call.1} parent=1 // pred_check_branch
      %14 = sbr.rel (0) target = $region5
    $region4: #{tpu_custom_call.1} parent=1 // pred_region
      %16 = vsyncadd [#allocation3], 0
      %s17 = sshll.u32 %s0, 4
      %s18 = int_to_ptr.hbm [resolvable:$true] %s17
      %s19 = sshll.u32 [#allocation2], 4
      %s20 = int_to_ptr.vmem [resolvable:$true] %s19
      %25 = dma.hbm_to_vmem [thread:$0]  %s18, 256, %s20, [#allocation3], 128, 128, 8
    $region5: #{tpu_custom_call.1} parent=1 // pred_fallthru
      _
    // Predicated region
    $region6: #{tpu_custom_call.1} parent=1 // pred_check
      _
    $region7: #{tpu_custom_call.1} parent=1 // pred_check_branch
      %27 = sbr.rel (0) target = $region9
    $region8: #{tpu_custom_call.1} parent=1 // pred_region
      %29 = vsyncadd [#allocation6], 0
      %s30 = sshll.u32 %s1, 4
      %s31 = int_to_ptr.hbm [resolvable:$true] %s30
      %s32 = sshll.u32 [#allocation5], 4
      %s33 = int_to_ptr.vmem [resolvable:$true] %s32
      %38 = dma.hbm_to_vmem [thread:$0]  %s31, 256, %s33, [#allocation6], 64, 64, 4
    $region9: #{tpu_custom_call.1} parent=1 // pred_fallthru
      _
    // Predicated region
    $region10: #{tpu_custom_call.1} parent=1 // pred_check
      _
    $region11: #{tpu_custom_call.1} parent=1 // pred_check_branch
      %40 = sbr.rel (0) target = $region13
    $region12: #{tpu_custom_call.1} parent=1 // pred_region
      _
    $region13: #{tpu_custom_call.1} parent=1 // pred_fallthru
      _
    // Predicated region
    $region14: #{tpu_custom_call.1} parent=1 // pred_check
      _
    $region15: #{tpu_custom_call.1} parent=1 // pred_check_branch
      %42 = sbr.rel (0) target = $region17
    $region16: #{tpu_custom_call.1} parent=1 // pred_region
      %44 = vsyncadd [#allocation6], 0
      %s45 = sshll.u32 %s3, 4
      %s46 = int_to_ptr.hbm [resolvable:$true] %s45
      %s47 = sshll.u32 [#allocation7], 4
      %s48 = int_to_ptr.vmem [resolvable:$true] %s47
      %53 = dma.hbm_to_vmem [thread:$0]  %s46, 1024, %s48, [#allocation6], 64, 64, 4
    $region17: #{tpu_custom_call.1} parent=1 // pred_fallthru
      _
    // Predicated region
    $region18: #{tpu_custom_call.1} parent=1 // pred_check
      _
    $region19: #{tpu_custom_call.1} parent=1 // pred_check_branch
      %55 = sbr.rel (0) target = $region21
    $region20: #{tpu_custom_call.1} parent=1 // pred_region
      _
    $region21: #{tpu_custom_call.1} parent=1 // pred_fallthru
      _
    // Predicated region
    $region22: #{tpu_custom_call.1} parent=1 // pred_check
      _
    $region23: #{tpu_custom_call.1} parent=1 // pred_check_branch
      %57 = sbr.rel (0) target = $region25
    $region24: #{tpu_custom_call.1} parent=1 // pred_region
      %59 = dma.done [#allocation3], 256
    $region25: #{tpu_custom_call.1} parent=1 // pred_fallthru
      _
    // Predicated region
    $region26: #{tpu_custom_call.1} parent=1 // pred_check
      _
    $region27: #{tpu_custom_call.1} parent=1 // pred_check_branch
      %61 = sbr.rel (0) target = $region29
    $region28: #{tpu_custom_call.1} parent=1 // pred_region
      %63 = dma.done [#allocation6], 256
    $region29: #{tpu_custom_call.1} parent=1 // pred_fallthru
      _
    // Predicated region
    $region30: #{tpu_custom_call.1} parent=1 // pred_check
      _
    $region31: #{tpu_custom_call.1} parent=1 // pred_check_branch
      %65 = sbr.rel (0) target = $region33
    $region32: #{tpu_custom_call.1} parent=1 // pred_region
      %67 = dma.done [#allocation6], 1024
    $region33: #{tpu_custom_call.1} parent=1 // pred_fallthru
      _
    %p69 = scmp.eq.s32.totalorder 0, 0
    // Predicated region
    $region34: #{tpu_custom_call.1} parent=1 // pred_check
      %p70 = pneg %p69
    $region35: #{tpu_custom_call.1} parent=1 // pred_check_branch
      %72 = sbr.rel (%p70) target = $region37
    $region36: #{tpu_custom_call.1} parent=1 // pred_region
      %73 = vst [vmem:[#allocation8] sm:$0xff] 0.0
      %74 = vst [vmem:[#allocation8 + $0x8] sm:$0xff] 0.0
    $region37: #{tpu_custom_call.1} parent=1 // pred_fallthru
      _
    %v75 = vld [vmem:[#allocation2] sm:$0xff]
    %v76 = vld [vmem:[#allocation2 + $0x8] sm:$0xff]
    %v77 = vpack.c.bf16 %v76, %v75
    %v78 = vld [vmem:[#allocation5] sm:$0xf]
    %v79 = vld [vmem:[#allocation5 + $0x4] sm:$0xf]
    %v80 = vld [vmem:[#allocation5 + $0x8] sm:$0xf]
    %v81 = vld [vmem:[#allocation5 + $0xc] sm:$0xf]
    %v82 = vld [vmem:[%s2] sm:$0x1]
    %v84 = vperm.slane %v82, 0
    %v90 = vunpack.c.l.b16 %v78
    %v91 = vunpack.c.l.b16 %v79
    %v92 = vunpack.c.l.b16 %v80
    %v93 = vunpack.c.l.b16 %v81
    %v94 = vpack.c.b16 %v91, %v90
    %v95 = vpack.c.b16 %v93, %v92
    %vm98 = vcmask 261120
    %v100 = vsel %vm98, %v77, 0
    %102 = vmatpush.bf16.msra.mxu0 0
    %103 = vmatpush.bf16.msra.mxu0 0
    %104 = vmatpush.bf16.msra.mxu0 0
    %105 = vmatpush.bf16.msra.mxu0 0
    %106 = vmatpush.bf16.msra.mxu0 0
    %107 = vmatpush.bf16.msra.mxu0 0
    %108 = vmatpush.bf16.msra.mxu0 %v95
    %109 = vmatpush.bf16.msra.mxu0 %v94
    %110 = vmatmul.bf16.gmra.mxu0 %v100
    %v111 = vpop.f32.mrf.mxu0
    %v112 = vadd.f32 %v84, %v111
    %v113 = vpop.f32.mrf.mxu0
    %v114 = vadd.f32 %v84, %v113
    %115 = vdwg.mxu0
    %v116 = vmax.f32 %v112, 0.0
    %v117 = vmax.f32 %v114, 0.0
    %v118 = vld [vmem:[#allocation8] sm:$0xff]
    %v119 = vld [vmem:[#allocation8 + $0x8] sm:$0xff]
    %v120 = vpack.c.bf16 %v117, %v116
    %v121 = vld [vmem:[#allocation7] sm:$0xf]
    %v122 = vld [vmem:[#allocation7 + $0x4] sm:$0xf]
    %v123 = vld [vmem:[#allocation7 + $0x8] sm:$0xf]
    %v124 = vld [vmem:[#allocation7 + $0xc] sm:$0xf]
    %v125 = vld [vmem:[#allocation7 + $0x10] sm:$0xf]
    %v126 = vld [vmem:[#allocation7 + $0x14] sm:$0xf]
    %v127 = vld [vmem:[#allocation7 + $0x18] sm:$0xf]
    %v128 = vld [vmem:[#allocation7 + $0x1c] sm:$0xf]
    %v129 = vld [vmem:[#allocation7 + $0x20] sm:$0xf]
    %v130 = vld [vmem:[#allocation7 + $0x24] sm:$0xf]
    %v131 = vld [vmem:[#allocation7 + $0x28] sm:$0xf]
    %v132 = vld [vmem:[#allocation7 + $0x2c] sm:$0xf]
    %v133 = vld [vmem:[#allocation7 + $0x30] sm:$0xf]
    %v134 = vld [vmem:[#allocation7 + $0x34] sm:$0xf]
    %v135 = vld [vmem:[#allocation7 + $0x38] sm:$0xf]
    %v136 = vld [vmem:[#allocation7 + $0x3c] sm:$0xf]
    %v153 = vunpack.c.l.b16 %v121
    %v154 = vunpack.c.l.b16 %v122
    %v155 = vunpack.c.l.b16 %v123
    %v156 = vunpack.c.l.b16 %v124
    %v157 = vunpack.c.l.b16 %v125
    %v158 = vunpack.c.l.b16 %v126
    %v159 = vunpack.c.l.b16 %v127
    %v160 = vunpack.c.l.b16 %v128
    %v161 = vunpack.c.l.b16 %v129
    %v162 = vunpack.c.l.b16 %v130
    %v163 = vunpack.c.l.b16 %v131
    %v164 = vunpack.c.l.b16 %v132
    %v165 = vunpack.c.l.b16 %v133
    %v166 = vunpack.c.l.b16 %v134
    %v167 = vunpack.c.l.b16 %v135
    %v168 = vunpack.c.l.b16 %v136
    %v169 = vpack.c.b16 %v154, %v153
    %v170 = vpack.c.b16 %v156, %v155
    %v171 = vpack.c.b16 %v158, %v157
    %v172 = vpack.c.b16 %v160, %v159
    %v173 = vpack.c.b16 %v162, %v161
    %v174 = vpack.c.b16 %v164, %v163
    %v175 = vpack.c.b16 %v166, %v165
    %v176 = vpack.c.b16 %v168, %v167
    %185 = vmatpush.bf16.msra.mxu0 %v176
    %186 = vmatpush.bf16.msra.mxu0 %v175
    %187 = vmatpush.bf16.msra.mxu0 %v174
    %188 = vmatpush.bf16.msra.mxu0 %v173
    %189 = vmatpush.bf16.msra.mxu0 %v172
    %190 = vmatpush.bf16.msra.mxu0 %v171
    %191 = vmatpush.bf16.msra.mxu0 %v170
    %192 = vmatpush.bf16.msra.mxu0 %v169
    %193 = vmatmul.bf16.gmra.mxu0 %v120
    %v194 = vpop.f32.mrf.mxu0
    %v195 = vadd.f32 0.0, %v194
    %v196 = vpop.f32.mrf.mxu0
    %v197 = vadd.f32 0.0, %v196
    %198 = vdwg.mxu0
    %v199 = vadd.f32 %v118, %v195
    %v200 = vadd.f32 %v119, %v197
    %201 = vst [vmem:[#allocation8] sm:$0xff] %v199
    %202 = vst [vmem:[#allocation8 + $0x8] sm:$0xff] %v200
    // Predicated region
    $region38: #{tpu_custom_call.1} parent=1 // pred_check
      %p203 = pneg %p69
    $region39: #{tpu_custom_call.1} parent=1 // pred_check_branch
      %205 = sbr.rel (%p203) target = $region41
    $region40: #{tpu_custom_call.1} parent=1 // pred_region
      %v206 = vld [vmem:[#allocation8] sm:$0xff]
      %v207 = vld [vmem:[#allocation8 + $0x8] sm:$0xff]
      %v208 = vld [vmem:[%s4] sm:$0x1]
      %v210 = vperm.slane %v208, 0
      %v212 = vadd.f32 %v206, %v210
      %v213 = vadd.f32 %v207, %v210
      %214 = vst [vmem:[#allocation8] sm:$0xff] %v212
      %215 = vst [vmem:[#allocation8 + $0x8] sm:$0xff] %v213
    $region41: #{tpu_custom_call.1} parent=1 // pred_fallthru
      _
    // Predicated region
    $region42: #{tpu_custom_call.1} parent=1 // pred_check
      _
    $region43: #{tpu_custom_call.1} parent=1 // pred_check_branch
      %217 = sbr.rel (0) target = $region45
    $region44: #{tpu_custom_call.1} parent=1 // pred_region
      %219 = vsyncadd [#allocation4], 0
      %s220 = sshll.u32 [#allocation8], 4
      %s221 = int_to_ptr.vmem [resolvable:$true] %s220
      %s222 = sshll.u32 %s5, 4
      %s223 = int_to_ptr.hbm [resolvable:$true] %s222
      %228 = dma.vmem_to_hbm [thread:$0]  %s221, 256, %s223, [#allocation4], 128, 128, 8
    $region45: #{tpu_custom_call.1} parent=1 // pred_fallthru
      _
    // Predicated region
    $region46: #{tpu_custom_call.1} parent=1 // pred_check
      _
    $region47: #{tpu_custom_call.1} parent=1 // pred_check_branch
      %230 = sbr.rel (0) target = $region49
    $region48: #{tpu_custom_call.1} parent=1 // pred_region
      %232 = dma.done [#allocation4], 256
    $region49: #{tpu_custom_call.1} parent=1 // pred_fallthru
      _
    %233 = vsyncpa [#allocation3], 1
    %234 = vsyncpa [#allocation6], 1
    %235 = vsyncpa [#allocation4], 1

</llo_original>
